<compile_context>
chip_gen: v7x
topology: tpu7x:2x2x1
jax: 0.10.0
libtpu: 0.0.40
codegen_flags: <defaults>
</compile_context>

<pallas_src>
import functools
import numpy as np
import jax
import jax.numpy as jnp
from jax.experimental import pallas as pl
from jax.experimental.pallas import tpu as pltpu


OUT_W = 128   # lane-dense output slab width (must be >= 1 + num_outputs)


def _round_up(x, m):
    return (x + m - 1) // m * m


# ----------------------------- Pallas kernel -------------------------------

def _actor_critic_kernel(x_ref, pk_ref, out_ref, *,
                         off_b0, off_w2, off_b2, off_w3, off_b3):
    nin = x_ref.shape[1]
    H = pk_ref.shape[1]            # fused hidden width: 256 (value) + 128 (policy, padded)

    x = x_ref[...]                                                  # (B, nin)

    # layer 1 -- both heads fused along the lane axis
    w0 = pk_ref[0:nin, :]
    b0 = pk_ref[off_b0:off_b0 + 1, :]
    h = jnp.maximum(jnp.dot(x, w0, preferred_element_type=jnp.float32) + b0, 0.0)

    # layer 2 -- block-diagonal (value block || policy block)
    w2 = pk_ref[off_w2:off_w2 + H, :]
    b2 = pk_ref[off_b2:off_b2 + 1, :]
    h = jnp.maximum(jnp.dot(h, w2, preferred_element_type=jnp.float32) + b2, 0.0)

    # heads -- one (H, OUT_W) matmul: v in col 0, mu in cols 1..num_outputs
    w3 = pk_ref[off_w3:off_w3 + H, 0:OUT_W]
    b3 = pk_ref[off_b3:off_b3 + 1, 0:OUT_W]
    o = jnp.dot(h, w3, preferred_element_type=jnp.float32) + b3

    # tanh only on the mu (and zero-padding) columns; col 0 (v) stays linear.
    col = jax.lax.broadcasted_iota(jnp.int32, o.shape, 1)
    out_ref[...] = jnp.where(col == 0, o, jnp.tanh(o))


# ------------------------------ wrapper -------------------------------------

def actor_critic_forward(packed, inputs, *, num_outputs,
                         off_b0, off_w2, off_b2, off_w3, off_b3):
    """Fused forward. inputs: (B, num_inputs). Returns (mu, log_std, v)."""
    B, _ = inputs.shape
    vmem = functools.partial(pl.BlockSpec, memory_space=pltpu.MemorySpace.VMEM)

    out = pl.pallas_call(
        functools.partial(_actor_critic_kernel,
                          off_b0=off_b0, off_w2=off_w2, off_b2=off_b2,
                          off_w3=off_w3, off_b3=off_b3),
        out_shape=jax.ShapeDtypeStruct((B, OUT_W), jnp.float32),
        in_specs=[vmem(), vmem()],
        out_specs=vmem(),
    )(inputs.astype(jnp.float32), packed)

    v = out[:, :1]
    mu = out[:, 1:1 + num_outputs]
    log_std = jnp.zeros_like(mu)          # self.noise == 0 in the reference
    return mu, log_std, v


# --------------------------- parameter handling ------------------------------

def _linear_init(key, fan_in, fan_out):
    """PyTorch nn.Linear default init; weight stored (in, out) for x @ w."""
    kw, kb = jax.random.split(key)
    bound = 1.0 / np.sqrt(fan_in)
    w = jax.random.uniform(kw, (fan_in, fan_out), jnp.float32, -bound, bound)
    b = jax.random.uniform(kb, (fan_out,), jnp.float32, -bound, bound)
    return w, b


def init_raw_params(key, num_inputs, num_outputs,
                    hidden_layer=(64, 64), hidden_layer_v=(256, 256)):
    assert len(hidden_layer) == 2 and len(hidden_layer_v) == 2, \
        "kernel is specialized to the module defaults ([64,64] / [256,256])"
    ks = jax.random.split(key, 6)
    p = {}
    p["p0_w"], p["p0_b"] = _linear_init(ks[0], num_inputs, hidden_layer[0])
    p["p1_w"], p["p1_b"] = _linear_init(ks[1], hidden_layer[0], hidden_layer[1])
    p["mu_w"], p["mu_b"] = _linear_init(ks[2], hidden_layer[1], num_outputs)
    p["v0_w"], p["v0_b"] = _linear_init(ks[3], num_inputs, hidden_layer_v[0])
    p["v1_w"], p["v1_b"] = _linear_init(ks[4], hidden_layer_v[0], hidden_layer_v[1])
    p["v_w"], p["v_b"] = _linear_init(ks[5], hidden_layer_v[1], 1)
    return p


def pack_params(raw, num_inputs, num_outputs):
    """Pack all layers into ONE contiguous, aligned f32 buffer (done once)."""
    r = {k: np.asarray(v, np.float32) for k, v in raw.items()}
    h_p = r["p1_w"].shape[0]                      # 64
    h_v = r["v1_w"].shape[0]                      # 256
    h_pp = _round_up(max(h_p, 128), 128)          # policy width lane-padded
    H = h_v + h_pp                                # 384 (multiple of 128)
    assert h_v % 8 == 0 and H % 8 == 0 and 1 + num_outputs <= OUT_W

    # fused first layer: value block first, then zero-padded policy block
    w0 = np.zeros((num_inputs, H), np.float32)
    w0[:, :h_v] = r["v0_w"]
    w0[:, h_v:h_v + h_p] = r["p0_w"]
    b0 = np.zeros((H,), np.float32)
    b0[:h_v] = r["v0_b"]
    b0[h_v:h_v + h_p] = r["p0_b"]

    # block-diagonal second layer
    w2 = np.zeros((H, H), np.float32)
    w2[:h_v, :h_v] = r["v1_w"]
    w2[h_v:h_v + h_p, h_v:h_v + h_p] = r["p1_w"]
    b2 = np.zeros((H,), np.float32)
    b2[:h_v] = r["v1_b"]
    b2[h_v:h_v + h_p] = r["p1_b"]

    # fused heads: v -> col 0, mu -> cols 1..num_outputs, zeros elsewhere
    w3 = np.zeros((H, OUT_W), np.float32)
    w3[:h_v, 0] = r["v_w"][:, 0]
    w3[h_v:h_v + h_p, 1:1 + num_outputs] = r["mu_w"]
    b3 = np.zeros((OUT_W,), np.float32)
    b3[0] = r["v_b"][0]
    b3[1:1 + num_outputs] = r["mu_b"]

    # section starts are 8-row (sublane) aligned -> cheap static Ref slices
    nin_pad = _round_up(num_inputs, 8)
    off_b0 = nin_pad
    off_w2 = off_b0 + 8
    off_b2 = off_w2 + H
    off_w3 = off_b2 + 8
    off_b3 = off_w3 + H
    total = off_b3 + 8

    pk = np.zeros((total, H), np.float32)
    pk[:num_inputs, :] = w0
    pk[off_b0, :] = b0
    pk[off_w2:off_w2 + H, :] = w2
    pk[off_b2, :] = b2
    pk[off_w3:off_w3 + H, :OUT_W] = w3
    pk[off_b3, :OUT_W] = b3

    meta = dict(off_b0=off_b0, off_w2=off_w2, off_b2=off_b2,
                off_w3=off_w3, off_b3=off_b3)
    return jnp.asarray(pk), meta


# ------------------------- pure-JAX reference check --------------------------

def reference_forward(raw, x):
    p = jnp.maximum(x @ raw["p0_w"] + raw["p0_b"], 0.0)
    p = jnp.maximum(p @ raw["p1_w"] + raw["p1_b"], 0.0)
    mu = jnp.tanh(p @ raw["mu_w"] + raw["mu_b"])
    y = jnp.maximum(x @ raw["v0_w"] + raw["v0_b"], 0.0)
    y = jnp.maximum(y @ raw["v1_w"] + raw["v1_b"], 0.0)
    v = y @ raw["v_w"] + raw["v_b"]
    log_std = jnp.zeros_like(mu)                  # noise == 0
    return mu, log_std, v


# --------------------------------- main ---------------------------------------

if __name__ == "__main__":
    num_inputs, num_outputs, B = 32, 8, 2
    key = jax.random.PRNGKey(0)
    k_obs, k_par = jax.random.split(key)

    obs = jax.random.normal(k_obs, (B, num_inputs), jnp.float32)
    raw_params = init_raw_params(k_par, num_inputs, num_outputs)
    packed, meta = pack_params(raw_params, num_inputs, num_outputs)

    fwd = jax.jit(functools.partial(actor_critic_forward,
                                    num_outputs=num_outputs, **meta))
    mu, log_std, v = fwd(packed, obs)
    jax.block_until_ready((mu, log_std, v))

    # correctness vs. pure-JAX reference of the PyTorch module
    mu_r, log_std_r, v_r = reference_forward(raw_params, obs)

    assert mu.shape == (B, num_outputs)
    assert log_std.shape == (B, num_outputs)
    assert v.shape == (B, 1)
    assert bool(jnp.all(jnp.isfinite(mu))) and bool(jnp.all(jnp.isfinite(v)))
    np.testing.assert_allclose(np.asarray(mu), np.asarray(mu_r), rtol=1e-5, atol=1e-5)
    np.testing.assert_allclose(np.asarray(v), np.asarray(v_r), rtol=1e-5, atol=1e-5)
    np.testing.assert_allclose(np.asarray(log_std), np.asarray(log_std_r), atol=0)

    print("KERNEL_OK")
</pallas_src>

<mosaic_0001>
module attributes {stable_mosaic.version = 11 : i64} {
  func.func @_actor_critic_kernel(%arg0: memref<2x32xf32, #tpu.memory_space<vmem>>, %arg1: memref<824x384xf32, #tpu.memory_space<vmem>>, %arg2: memref<2x128xf32, #tpu.memory_space<vmem>>) attributes {dimension_semantics = [], scalar_prefetch = 0 : i64, scratch_operands = 0 : i64, tpu.core_type = #tpu.core_type<tc>} {
    %c0 = arith.constant 0 : index
    %c0_0 = arith.constant 0 : index
    %0 = vector.load %arg0[%c0, %c0_0] : memref<2x32xf32, #tpu.memory_space<vmem>>, vector<2x32xf32>
    %c0_1 = arith.constant 0 : index
    %c0_2 = arith.constant 0 : index
    %1 = vector.load %arg1[%c0_1, %c0_2] : memref<824x384xf32, #tpu.memory_space<vmem>>, vector<32x384xf32>
    %c32 = arith.constant 32 : index
    %c0_3 = arith.constant 0 : index
    %2 = vector.load %arg1[%c32, %c0_3] : memref<824x384xf32, #tpu.memory_space<vmem>>, vector<1x384xf32>
    %cst = arith.constant dense<0.000000e+00> : vector<2x384xf32>
    %3 = tpu.matmul %0, %1, %cst {dimension_numbers = #tpu.dot_dimension_numbers<[1], [0], [0], [1], [0, 0, 1, 1], [], []>} : vector<2x32xf32>, vector<32x384xf32>, vector<2x384xf32> -> vector<2x384xf32>
    %4 = vector.broadcast %2 : vector<1x384xf32> to vector<2x384xf32>
    %5 = arith.addf %3, %4 : vector<2x384xf32>
    %cst_4 = arith.constant 0.000000e+00 : f32
    %6 = vector.broadcast %cst_4 : f32 to vector<2x384xf32>
    %7 = arith.maximumf %5, %6 : vector<2x384xf32>
    %c40 = arith.constant 40 : index
    %c0_5 = arith.constant 0 : index
    %8 = vector.load %arg1[%c40, %c0_5] : memref<824x384xf32, #tpu.memory_space<vmem>>, vector<384x384xf32>
    %c424 = arith.constant 424 : index
    %c0_6 = arith.constant 0 : index
    %9 = vector.load %arg1[%c424, %c0_6] : memref<824x384xf32, #tpu.memory_space<vmem>>, vector<1x384xf32>
    %cst_7 = arith.constant dense<0.000000e+00> : vector<2x384xf32>
    %10 = tpu.matmul %7, %8, %cst_7 {dimension_numbers = #tpu.dot_dimension_numbers<[1], [0], [0], [1], [0, 0, 1, 1], [], []>} : vector<2x384xf32>, vector<384x384xf32>, vector<2x384xf32> -> vector<2x384xf32>
    %11 = vector.broadcast %9 : vector<1x384xf32> to vector<2x384xf32>
    %12 = arith.addf %10, %11 : vector<2x384xf32>
    %cst_8 = arith.constant 0.000000e+00 : f32
    %13 = vector.broadcast %cst_8 : f32 to vector<2x384xf32>
    %14 = arith.maximumf %12, %13 : vector<2x384xf32>
    %c432 = arith.constant 432 : index
    %c0_9 = arith.constant 0 : index
    %15 = vector.load %arg1[%c432, %c0_9] : memref<824x384xf32, #tpu.memory_space<vmem>>, vector<384x128xf32>
    %c816 = arith.constant 816 : index
    %c0_10 = arith.constant 0 : index
    %16 = vector.load %arg1[%c816, %c0_10] : memref<824x384xf32, #tpu.memory_space<vmem>>, vector<1x128xf32>
    %cst_11 = arith.constant dense<0.000000e+00> : vector<2x128xf32>
    %17 = tpu.matmul %14, %15, %cst_11 {dimension_numbers = #tpu.dot_dimension_numbers<[1], [0], [0], [1], [0, 0, 1, 1], [], []>} : vector<2x384xf32>, vector<384x128xf32>, vector<2x128xf32> -> vector<2x128xf32>
    %18 = vector.broadcast %16 : vector<1x128xf32> to vector<2x128xf32>
    %19 = arith.addf %17, %18 : vector<2x128xf32>
    %20 = tpu.iota {dimensions = array<i32: 1>} : vector<2x128xi32>
    %c0_i32 = arith.constant 0 : i32
    %21 = vector.broadcast %c0_i32 : i32 to vector<2x128xi32>
    %22 = arith.cmpi eq, %20, %21 : vector<2x128xi32>
    %23 = math.tanh %19 : vector<2x128xf32>
    %24 = arith.select %22, %19, %23 : vector<2x128xi1>, vector<2x128xf32>
    %c0_12 = arith.constant 0 : index
    %c0_13 = arith.constant 0 : index
    %25 = vector.load %arg2[%c0_12, %c0_13] : memref<2x128xf32, #tpu.memory_space<vmem>>, vector<2x128xf32>
    tpu.vector_store %arg2[%c0_12, %c0_13], %24 {strides = array<i32>} : memref<2x128xf32, #tpu.memory_space<vmem>>, vector<2x128xf32>,
    return
  }
}

</mosaic_0001>

<llo_original>
// kernel: actor_critic_forward.1
$region0: #{actor_critic_forward.1}
  #allocation0 [shape = 'u32[]', space=smem, size = 0x4, offset = 0x4, fixed_abs, tag = 'smem constant byte address 0x4 - core index']
  #allocation1 [shape = 'u32[144,128]{1,0:T(1,128)}', space=vmem, size = 0x12000, scoped, tag = 'internal scratch']
  %s0 = inlined_call_operand.hbm [shape: f32[2,32], index: 0, kind: input, shape index: {}]
  %s1 = inlined_call_operand.hbm [shape: f32[824,384], index: 1, kind: input, shape index: {}]
  %s2 = inlined_call_operand.vmem [shape: f32[2,128], index: 2, kind: output, shape index: {}]
  %s3 = sld [smem:[#allocation0]]
  $region26: #{actor_critic_forward.1} parent=0
    _
  %s5 = ssub.s32 1, %s3
  %s6 = scalar_select 0, %s5, %s3
  $region1: #{actor_critic_forward.1} parent=0
    #allocation2 [shape = 'u8[1024]{0}', space=vmem, size = 0x400, scoped, tag = 'input window, operand 0, single buffered']
    #allocation3 [shape = 's32[1]{0}', space=sflag, size = 0x4, scoped, tag = 'scoped memory for actor_critic_forward.1']
    #allocation4 [shape = 'u8[1265664]{0}', space=vmem, size = 0x135000, scoped, tag = 'input window, operand 1, single buffered']
    #allocation5 [shape = 's32[1]{0}', space=sflag, size = 0x4, scoped, tag = 'scoped memory for actor_critic_forward.1']
    %7 = vsyncpa [#allocation3], 0
    %8 = vsyncpa [#allocation5], 0
    // Predicated region
    $region2: #{actor_critic_forward.1} parent=1 // pred_check
      _
    $region3: #{actor_critic_forward.1} parent=1 // pred_check_branch
      %10 = sbr.rel (0) target = $region5
    $region4: #{actor_critic_forward.1} parent=1 // pred_region
      %s12 = ssub.s32 32, 32
      %13 = vsyncadd [#allocation3], %s12
      %s15 = sshll.u32 [#allocation2], 4
      %s16 = int_to_ptr.vmem [resolvable:$true] %s15
      %18 = dma.hbm_to_vmem [thread:$0]  %s0, 32, %s16, [#allocation3]
    $region5: #{actor_critic_forward.1} parent=1 // pred_fallthru
      _
    // Predicated region
    $region6: #{actor_critic_forward.1} parent=1 // pred_check
      _
    $region7: #{actor_critic_forward.1} parent=1 // pred_check_branch
      %20 = sbr.rel (0) target = $region9
    $region8: #{actor_critic_forward.1} parent=1 // pred_region
      %s22 = ssub.s32 39552, 39552
      %23 = vsyncadd [#allocation5], %s22
      %s24 = sshll.u32 [#allocation4], 4
      %s25 = int_to_ptr.vmem [resolvable:$true] %s24
      %30 = dma.hbm_to_vmem [thread:$0]  %s1, 39552, %s25, [#allocation5], 384, 384, 24
    $region9: #{actor_critic_forward.1} parent=1 // pred_fallthru
      _
    // Predicated region
    $region10: #{actor_critic_forward.1} parent=1 // pred_check
      _
    $region11: #{actor_critic_forward.1} parent=1 // pred_check_branch
      %32 = sbr.rel (0) target = $region13
    $region12: #{actor_critic_forward.1} parent=1 // pred_region
      %33 = dma.done [#allocation3], 32
    $region13: #{actor_critic_forward.1} parent=1 // pred_fallthru
      _
    // Predicated region
    $region14: #{actor_critic_forward.1} parent=1 // pred_check
      _
    $region15: #{actor_critic_forward.1} parent=1 // pred_check_branch
      %35 = sbr.rel (0) target = $region17
    $region16: #{actor_critic_forward.1} parent=1 // pred_region
      %36 = dma.done [#allocation5], 39552
    $region17: #{actor_critic_forward.1} parent=1 // pred_fallthru
      _
    %v37 = vld [vmem:[#allocation2] sm:$0x3]
    %v38 = vld [vmem:[#allocation4] sm:$0xff]
    %v39 = vld [vmem:[#allocation4 + $0x8] sm:$0xff]
    %v40 = vld [vmem:[#allocation4 + $0x10] sm:$0xff]
    %v41 = vld [vmem:[#allocation4 + $0x18] sm:$0xff]
    %v42 = vld [vmem:[#allocation4 + $0x20] sm:$0xff]
    %v43 = vld [vmem:[#allocation4 + $0x28] sm:$0xff]
    %v44 = vld [vmem:[#allocation4 + $0x30] sm:$0xff]
    %v45 = vld [vmem:[#allocation4 + $0x38] sm:$0xff]
    %v46 = vld [vmem:[#allocation4 + $0x40] sm:$0xff]
    %v47 = vld [vmem:[#allocation4 + $0x48] sm:$0xff]
    %v48 = vld [vmem:[#allocation4 + $0x50] sm:$0xff]
    %v49 = vld [vmem:[#allocation4 + $0x58] sm:$0xff]
    %s50 = scalar_lea.vmem [#allocation4], 96
    %v51 = vld [vmem:[%s50] ss:$8 sm:$0x7]
    %v53 = vlaneseq
    %v54 = vshrl.u32 %v53, 7
    %v55 = vsub.s32 0, %v54
    %v56 = vrot.slane %v51, %v55
    %v57 = vlaneseq
    %v58 = vshrl.u32 %v57, 7
    %v59 = vsub.s32 1, %v58
    %v60 = vrot.slane %v51, %v59
    %v61 = vlaneseq
    %v62 = vshrl.u32 %v61, 7
    %v63 = vsub.s32 2, %v62
    %v64 = vrot.slane %v51, %v63
    %vm68 = vcmask 261120
    %v70 = vsel %vm68, %v37, 0
    %72 = vmatprep.subr.mxu0 %v39
    %73 = vmatpush1.msra.mxu0 %v38
    %74 = vmatprep.subr.mxu0 %v42
    %75 = vmatpush1.msra.mxu0 %v41
    %76 = vmatprep.subr.mxu0 %v45
    %77 = vmatpush1.msra.mxu0 %v44
    %78 = vmatprep.subr.mxu0 %v48
    %79 = vmatpush1.msra.mxu0 %v47
    %80 = vmatprep.subr.mxu0 0.0
    %81 = vmatpush1.msra.mxu0 0.0
    %82 = vmatprep.subr.mxu0 0.0
    %83 = vmatpush1.msra.mxu0 0.0
    %84 = vmatprep.subr.mxu0 0.0
    %85 = vmatpush1.msra.mxu0 0.0
    %86 = vmatprep.subr.mxu0 0.0
    %87 = vmatpush1.msra.mxu0 0.0
    %88 = vmatprep.subr.mxu0 0.0
    %89 = vmatpush1.msra.mxu0 0.0
    %90 = vmatprep.subr.mxu0 0.0
    %91 = vmatpush1.msra.mxu0 0.0
    %92 = vmatprep.subr.mxu0 0.0
    %93 = vmatpush1.msra.mxu0 0.0
    %94 = vmatprep.subr.mxu0 0.0
    %95 = vmatpush1.msra.mxu0 0.0
    %96 = vmatprep.subr.mxu0 0.0
    %97 = vmatpush1.msra.mxu0 0.0
    %98 = vmatprep.subr.mxu0 0.0
    %99 = vmatpush1.msra.mxu0 0.0
    %100 = vmatprep.subr.mxu0 0.0
    %101 = vmatpush1.msra.mxu0 0.0
    %102 = vmatprep.subr.mxu0 0.0
    %103 = vmatpush1.msra.mxu0 0.0
    %104 = vmatprep.subr.mxu0 0.0
    %105 = vmatpush1.msra.mxu0 0.0
    %106 = vmatprep.subr.mxu0 0.0
    %107 = vmatpush1.msra.mxu0 0.0
    %108 = vmatprep.subr.mxu0 0.0
    %109 = vmatpush1.msra.mxu0 0.0
    %110 = vmatprep.subr.mxu0 0.0
    %111 = vmatpush1.msra.mxu0 0.0
    %112 = vmatprep.subr.mxu0 0.0
    %113 = vmatpush1.msra.mxu0 0.0
    %114 = vmatprep.subr.mxu0 0.0
    %115 = vmatpush1.msra.mxu0 0.0
    %116 = vmatprep.subr.mxu0 0.0
    %117 = vmatpush1.msra.mxu0 0.0
    %118 = vmatprep.subr.mxu0 0.0
    %119 = vmatpush1.msra.mxu0 0.0
    %120 = vmatprep.subr.mxu0 0.0
    %121 = vmatpush1.msra.mxu0 0.0
    %122 = vmatprep.subr.mxu0 0.0
    %123 = vmatpush1.msra.mxu0 0.0
    %124 = vmatprep.subr.mxu0 0.0
    %125 = vmatpush1.msra.mxu0 0.0
    %126 = vmatprep.subr.mxu0 0.0
    %127 = vmatpush1.msra.mxu0 0.0
    %128 = vmatprep.subr.mxu0 0.0
    %129 = vmatpush1.msra.mxu0 0.0
    %130 = vmatprep.subr.mxu0 0.0
    %131 = vmatpush1.msra.mxu0 0.0
    %132 = vmatprep.subr.mxu0 0.0
    %133 = vmatpush1.msra.mxu0 0.0
    %134 = vmatprep.subr.mxu0 0.0
    %135 = vmatpush1.msra.mxu0 0.0
    %136 = vmatprep.mubr.f32.mxu0 0.0
    %137 = vmatmul.mubr.f32.gmra.mrb[0].mxu0 %v70
    %v138 = vpop.f32.mrb[0].mxu0
    %v139 = vadd.f32 %v56, %v138
    %v140 = vpop.f32.mrb[0].mxu0
    %v141 = vadd.f32 %v60, %v140
    %142 = vdwg.mxu0
    %143 = vmatprep.subr.mxu0 0.0
    %144 = vmatpush1.msra.mxu0 %v40
    %145 = vmatprep.subr.mxu0 0.0
    %146 = vmatpush1.msra.mxu0 %v43
    %147 = vmatprep.subr.mxu0 0.0
    %148 = vmatpush1.msra.mxu0 %v46
    %149 = vmatprep.subr.mxu0 0.0
    %150 = vmatpush1.msra.mxu0 %v49
    %151 = vmatprep.subr.mxu0 0.0
    %152 = vmatpush1.msra.mxu0 0.0
    %153 = vmatprep.subr.mxu0 0.0
    %154 = vmatpush1.msra.mxu0 0.0
    %155 = vmatprep.subr.mxu0 0.0
    %156 = vmatpush1.msra.mxu0 0.0
    %157 = vmatprep.subr.mxu0 0.0
    %158 = vmatpush1.msra.mxu0 0.0
    %159 = vmatprep.subr.mxu0 0.0
    %160 = vmatpush1.msra.mxu0 0.0
    %161 = vmatprep.subr.mxu0 0.0
    %162 = vmatpush1.msra.mxu0 0.0
    %163 = vmatprep.subr.mxu0 0.0
    %164 = vmatpush1.msra.mxu0 0.0
    %165 = vmatprep.subr.mxu0 0.0
    %166 = vmatpush1.msra.mxu0 0.0
    %167 = vmatprep.subr.mxu0 0.0
    %168 = vmatpush1.msra.mxu0 0.0
    %169 = vmatprep.subr.mxu0 0.0
    %170 = vmatpush1.msra.mxu0 0.0
    %171 = vmatprep.subr.mxu0 0.0
    %172 = vmatpush1.msra.mxu0 0.0
    %173 = vmatprep.subr.mxu0 0.0
    %174 = vmatpush1.msra.mxu0 0.0
    %175 = vmatprep.subr.mxu0 0.0
    %176 = vmatpush1.msra.mxu0 0.0
    %177 = vmatprep.subr.mxu0 0.0
    %178 = vmatpush1.msra.mxu0 0.0
    %179 = vmatprep.subr.mxu0 0.0
    %180 = vmatpush1.msra.mxu0 0.0
    %181 = vmatprep.subr.mxu0 0.0
    %182 = vmatpush1.msra.mxu0 0.0
    %183 = vmatprep.subr.mxu0 0.0
    %184 = vmatpush1.msra.mxu0 0.0
    %185 = vmatprep.subr.mxu0 0.0
    %186 = vmatpush1.msra.mxu0 0.0
    %187 = vmatprep.subr.mxu0 0.0
    %188 = vmatpush1.msra.mxu0 0.0
    %189 = vmatprep.subr.mxu0 0.0
    %190 = vmatpush1.msra.mxu0 0.0
    %191 = vmatprep.subr.mxu0 0.0
    %192 = vmatpush1.msra.mxu0 0.0
    %193 = vmatprep.subr.mxu0 0.0
    %194 = vmatpush1.msra.mxu0 0.0
    %195 = vmatprep.subr.mxu0 0.0
    %196 = vmatpush1.msra.mxu0 0.0
    %197 = vmatprep.subr.mxu0 0.0
    %198 = vmatpush1.msra.mxu0 0.0
    %199 = vmatprep.subr.mxu0 0.0
    %200 = vmatpush1.msra.mxu0 0.0
    %201 = vmatprep.subr.mxu0 0.0
    %202 = vmatpush1.msra.mxu0 0.0
    %203 = vmatprep.subr.mxu0 0.0
    %204 = vmatpush1.msra.mxu0 0.0
    %205 = vmatprep.subr.mxu0 0.0
    %206 = vmatpush1.msra.mxu0 0.0
    %207 = vmatprep.mubr.f32.mxu0 0.0
    %208 = vmatmul.mubr.f32.gmra.mrb[0].mxu0 %v70
    %v209 = vpop.f32.mrb[0].mxu0
    %v210 = vadd.f32 %v64, %v209
    %v211 = vpop.f32.mrb[0].mxu0
    %212 = vdwg.mxu0
    %v213 = vmax.f32 %v139, 0.0
    %v214 = vmax.f32 %v141, 0.0
    %v215 = vmax.f32 %v210, 0.0
    %v216 = vld [vmem:[#allocation4 + $0x78] sm:$0xff]
    %v217 = vld [vmem:[#allocation4 + $0x80] sm:$0xff]
    %v218 = vld [vmem:[#allocation4 + $0x88] sm:$0xff]
    %v219 = vld [vmem:[#allocation4 + $0x90] sm:$0xff]
    %v220 = vld [vmem:[#allocation4 + $0x98] sm:$0xff]
    %v221 = vld [vmem:[#allocation4 + $0xa0] sm:$0xff]
    %v222 = vld [vmem:[#allocation4 + $0xa8] sm:$0xff]
    %v223 = vld [vmem:[#allocation4 + $0xb0] sm:$0xff]
    %v224 = vld [vmem:[#allocation4 + $0xb8] sm:$0xff]
    %v225 = vld [vmem:[#allocation4 + $0xc0] sm:$0xff]
    %v226 = vld [vmem:[#allocation4 + $0xc8] sm:$0xff]
    %v227 = vld [vmem:[#allocation4 + $0xd0] sm:$0xff]
    %v228 = vld [vmem:[#allocation4 + $0xd8] sm:$0xff]
    %v229 = vld [vmem:[#allocation4 + $0xe0] sm:$0xff]
    %v230 = vld [vmem:[#allocation4 + $0xe8] sm:$0xff]
    %v231 = vld [vmem:[#allocation4 + $0xf0] sm:$0xff]
    %v232 = vld [vmem:[#allocation4 + $0xf8] sm:$0xff]
    %v233 = vld [vmem:[#allocation4 + $0x100] sm:$0xff]
    %v234 = vld [vmem:[#allocation4 + $0x108] sm:$0xff]
    %v235 = vld [vmem:[#allocation4 + $0x110] sm:$0xff]
    %v236 = vld [vmem:[#allocation4 + $0x118] sm:$0xff]
    %v237 = vld [vmem:[#allocation4 + $0x120] sm:$0xff]
    %v238 = vld [vmem:[#allocation4 + $0x128] sm:$0xff]
    %v239 = vld [vmem:[#allocation4 + $0x130] sm:$0xff]
    %v240 = vld [vmem:[#allocation4 + $0x138] sm:$0xff]
    %v241 = vld [vmem:[#allocation4 + $0x140] sm:$0xff]
    %v242 = vld [vmem:[#allocation4 + $0x148] sm:$0xff]
    %v243 = vld [vmem:[#allocation4 + $0x150] sm:$0xff]
    %v244 = vld [vmem:[#allocation4 + $0x158] sm:$0xff]
    %v245 = vld [vmem:[#allocation4 + $0x160] sm:$0xff]
    %v246 = vld [vmem:[#allocation4 + $0x168] sm:$0xff]
    %v247 = vld [vmem:[#allocation4 + $0x170] sm:$0xff]
    %v248 = vld [vmem:[#allocation4 + $0x178] sm:$0xff]
    %v249 = vld [vmem:[#allocation4 + $0x180] sm:$0xff]
    %v250 = vld [vmem:[#allocation4 + $0x188] sm:$0xff]
    %v251 = vld [vmem:[#allocation4 + $0x190] sm:$0xff]
    %v252 = vld [vmem:[#allocation4 + $0x198] sm:$0xff]
    %v253 = vld [vmem:[#allocation4 + $0x1a0] sm:$0xff]
    %v254 = vld [vmem:[#allocation4 + $0x1a8] sm:$0xff]
    %v255 = vld [vmem:[#allocation4 + $0x1b0] sm:$0xff]
    %v256 = vld [vmem:[#allocation4 + $0x1b8] sm:$0xff]
    %v257 = vld [vmem:[#allocation4 + $0x1c0] sm:$0xff]
    %v258 = vld [vmem:[#allocation4 + $0x1c8] sm:$0xff]
    %v259 = vld [vmem:[#allocation4 + $0x1d0] sm:$0xff]
    %v260 = vld [vmem:[#allocation4 + $0x1d8] sm:$0xff]
    %v261 = vld [vmem:[#allocation4 + $0x1e0] sm:$0xff]
    %v262 = vld [vmem:[#allocation4 + $0x1e8] sm:$0xff]
    %v263 = vld [vmem:[#allocation4 + $0x1f0] sm:$0xff]
    %v264 = vld [vmem:[#allocation4 + $0x1f8] sm:$0xff]
    %v265 = vld [vmem:[#allocation4 + $0x200] sm:$0xff]
    %v266 = vld [vmem:[#allocation4 + $0x208] sm:$0xff]
    %v267 = vld [vmem:[#allocation4 + $0x210] sm:$0xff]
    %v268 = vld [vmem:[#allocation4 + $0x218] sm:$0xff]
    %v269 = vld [vmem:[#allocation4 + $0x220] sm:$0xff]
    %v270 = vld [vmem:[#allocation4 + $0x228] sm:$0xff]
    %v271 = vld [vmem:[#allocation4 + $0x230] sm:$0xff]
    %v272 = vld [vmem:[#allocation4 + $0x238] sm:$0xff]
    %v273 = vld [vmem:[#allocation4 + $0x240] sm:$0xff]
    %v274 = vld [vmem:[#allocation4 + $0x248] sm:$0xff]
    %v275 = vld [vmem:[#allocation4 + $0x250] sm:$0xff]
    %v276 = vld [vmem:[#allocation4 + $0x258] sm:$0xff]
    %v277 = vld [vmem:[#allocation4 + $0x260] sm:$0xff]
    %v278 = vld [vmem:[#allocation4 + $0x268] sm:$0xff]
    %v279 = vld [vmem:[#allocation4 + $0x270] sm:$0xff]
    %v280 = vld [vmem:[#allocation4 + $0x278] sm:$0xff]
    %v281 = vld [vmem:[#allocation4 + $0x280] sm:$0xff]
    %v282 = vld [vmem:[#allocation4 + $0x288] sm:$0xff]
    %v283 = vld [vmem:[#allocation4 + $0x290] sm:$0xff]
    %v284 = vld [vmem:[#allocation4 + $0x298] sm:$0xff]
    %v285 = vld [vmem:[#allocation4 + $0x2a0] sm:$0xff]
    %v286 = vld [vmem:[#allocation4 + $0x2a8] sm:$0xff]
    %v287 = vld [vmem:[#allocation4 + $0x2b0] sm:$0xff]
    %v288 = vld [vmem:[#allocation4 + $0x2b8] sm:$0xff]
    %v289 = vld [vmem:[#allocation4 + $0x2c0] sm:$0xff]
    %v290 = vld [vmem:[#allocation4 + $0x2c8] sm:$0xff]
    %v291 = vld [vmem:[#allocation4 + $0x2d0] sm:$0xff]
    %v292 = vld [vmem:[#allocation4 + $0x2d8] sm:$0xff]
    %v293 = vld [vmem:[#allocation4 + $0x2e0] sm:$0xff]
    %v294 = vld [vmem:[#allocation4 + $0x2e8] sm:$0xff]
    %v295 = vld [vmem:[#allocation4 + $0x2f0] sm:$0xff]
    %v296 = vld [vmem:[#allocation4 + $0x2f8] sm:$0xff]
    %v297 = vld [vmem:[#allocation4 + $0x300] sm:$0xff]
    %v298 = vld [vmem:[#allocation4 + $0x308] sm:$0xff]
    %v299 = vld [vmem:[#allocation4 + $0x310] sm:$0xff]
    %v300 = vld [vmem:[#allocation4 + $0x318] sm:$0xff]
    %v301 = vld [vmem:[#allocation4 + $0x320] sm:$0xff]
    %v302 = vld [vmem:[#allocation4 + $0x328] sm:$0xff]
    %v303 = vld [vmem:[#allocation4 + $0x330] sm:$0xff]
    %v304 = vld [vmem:[#allocation4 + $0x338] sm:$0xff]
    %v305 = vld [vmem:[#allocation4 + $0x340] sm:$0xff]
    %v306 = vld [vmem:[#allocation4 + $0x348] sm:$0xff]
    %v307 = vld [vmem:[#allocation4 + $0x350] sm:$0xff]
    %v308 = vld [vmem:[#allocation4 + $0x358] sm:$0xff]
    %v309 = vld [vmem:[#allocation4 + $0x360] sm:$0xff]
    %v310 = vld [vmem:[#allocation4 + $0x368] sm:$0xff]
    %v311 = vld [vmem:[#allocation4 + $0x370] sm:$0xff]
    %v312 = vld [vmem:[#allocation4 + $0x378] sm:$0xff]
    %v313 = vld [vmem:[#allocation4 + $0x380] sm:$0xff]
    %v314 = vld [vmem:[#allocation4 + $0x388] sm:$0xff]
    %v315 = vld [vmem:[#allocation4 + $0x390] sm:$0xff]
    %v316 = vld [vmem:[#allocation4 + $0x398] sm:$0xff]
    %v317 = vld [vmem:[#allocation4 + $0x3a0] sm:$0xff]
    %v318 = vld [vmem:[#allocation4 + $0x3a8] sm:$0xff]
    %v319 = vld [vmem:[#allocation4 + $0x3b0] sm:$0xff]
    %v320 = vld [vmem:[#allocation4 + $0x3b8] sm:$0xff]
    %v321 = vld [vmem:[#allocation4 + $0x3c0] sm:$0xff]
    %v322 = vld [vmem:[#allocation4 + $0x3c8] sm:$0xff]
    %v323 = vld [vmem:[#allocation4 + $0x3d0] sm:$0xff]
    %v324 = vld [vmem:[#allocation4 + $0x3d8] sm:$0xff]
    %v325 = vld [vmem:[#allocation4 + $0x3e0] sm:$0xff]
    %v326 = vld [vmem:[#allocation4 + $0x3e8] sm:$0xff]
    %v327 = vld [vmem:[#allocation4 + $0x3f0] sm:$0xff]
    %v328 = vld [vmem:[#allocation4 + $0x3f8] sm:$0xff]
    %v329 = vld [vmem:[#allocation4 + $0x400] sm:$0xff]
    %v330 = vld [vmem:[#allocation4 + $0x408] sm:$0xff]
    %v331 = vld [vmem:[#allocation4 + $0x410] sm:$0xff]
    %v332 = vld [vmem:[#allocation4 + $0x418] sm:$0xff]
    %v333 = vld [vmem:[#allocation4 + $0x420] sm:$0xff]
    %v334 = vld [vmem:[#allocation4 + $0x428] sm:$0xff]
    %v335 = vld [vmem:[#allocation4 + $0x430] sm:$0xff]
    %v336 = vld [vmem:[#allocation4 + $0x438] sm:$0xff]
    %v337 = vld [vmem:[#allocation4 + $0x440] sm:$0xff]
    %v338 = vld [vmem:[#allocation4 + $0x448] sm:$0xff]
    %v339 = vld [vmem:[#allocation4 + $0x450] sm:$0xff]
    %v340 = vld [vmem:[#allocation4 + $0x458] sm:$0xff]
    %v341 = vld [vmem:[#allocation4 + $0x460] sm:$0xff]
    %v342 = vld [vmem:[#allocation4 + $0x468] sm:$0xff]
    %v343 = vld [vmem:[#allocation4 + $0x470] sm:$0xff]
    %v344 = vld [vmem:[#allocation4 + $0x478] sm:$0xff]
    %v345 = vld [vmem:[#allocation4 + $0x480] sm:$0xff]
    %v346 = vld [vmem:[#allocation4 + $0x488] sm:$0xff]
    %v347 = vld [vmem:[#allocation4 + $0x490] sm:$0xff]
    %v348 = vld [vmem:[#allocation4 + $0x498] sm:$0xff]
    %v349 = vld [vmem:[#allocation4 + $0x4a0] sm:$0xff]
    %v350 = vld [vmem:[#allocation4 + $0x4a8] sm:$0xff]
    %v351 = vld [vmem:[#allocation4 + $0x4b0] sm:$0xff]
    %v352 = vld [vmem:[#allocation4 + $0x4b8] sm:$0xff]
    %v353 = vld [vmem:[#allocation4 + $0x4c0] sm:$0xff]
    %v354 = vld [vmem:[#allocation4 + $0x4c8] sm:$0xff]
    %v355 = vld [vmem:[#allocation4 + $0x4d0] sm:$0xff]
    %v356 = vld [vmem:[#allocation4 + $0x4d8] sm:$0xff]
    %v357 = vld [vmem:[#allocation4 + $0x4e0] sm:$0xff]
    %v358 = vld [vmem:[#allocation4 + $0x4e8] sm:$0xff]
    %v359 = vld [vmem:[#allocation4 + $0x4f0] sm:$0xff]
    %s360 = scalar_lea.vmem [#allocation4], 1272
    %v361 = vld [vmem:[%s360] ss:$8 sm:$0x7]
    %v363 = vlaneseq
    %v364 = vshrl.u32 %v363, 7
    %v365 = vsub.s32 0, %v364
    %v366 = vrot.slane %v361, %v365
    %v367 = vlaneseq
    %v368 = vshrl.u32 %v367, 7
    %v369 = vsub.s32 1, %v368
    %v370 = vrot.slane %v361, %v369
    %v371 = vlaneseq
    %v372 = vshrl.u32 %v371, 7
    %v373 = vsub.s32 2, %v372
    %v374 = vrot.slane %v361, %v373
    %378 = vmatprep.subr.mxu0 %v217
    %379 = vmatpush1.msra.mxu0 %v216
    %380 = vmatprep.subr.mxu0 %v220
    %381 = vmatpush1.msra.mxu0 %v219
    %382 = vmatprep.subr.mxu0 %v223
    %383 = vmatpush1.msra.mxu0 %v222
    %384 = vmatprep.subr.mxu0 %v226
    %385 = vmatpush1.msra.mxu0 %v225
    %386 = vmatprep.subr.mxu0 %v229
    %387 = vmatpush1.msra.mxu0 %v228
    %388 = vmatprep.subr.mxu0 %v232
    %389 = vmatpush1.msra.mxu0 %v231
    %390 = vmatprep.subr.mxu0 %v235
    %391 = vmatpush1.msra.mxu0 %v234
    %392 = vmatprep.subr.mxu0 %v238
    %393 = vmatpush1.msra.mxu0 %v237
    %394 = vmatprep.subr.mxu0 %v241
    %395 = vmatpush1.msra.mxu0 %v240
    %396 = vmatprep.subr.mxu0 %v244
    %397 = vmatpush1.msra.mxu0 %v243
    %398 = vmatprep.subr.mxu0 %v247
    %399 = vmatpush1.msra.mxu0 %v246
    %400 = vmatprep.subr.mxu0 %v250
    %401 = vmatpush1.msra.mxu0 %v249
    %402 = vmatprep.subr.mxu0 %v253
    %403 = vmatpush1.msra.mxu0 %v252
    %404 = vmatprep.subr.mxu0 %v256
    %405 = vmatpush1.msra.mxu0 %v255
    %406 = vmatprep.subr.mxu0 %v259
    %407 = vmatpush1.msra.mxu0 %v258
    %408 = vmatprep.subr.mxu0 %v262
    %409 = vmatpush1.msra.mxu0 %v261
    %410 = vmatprep.subr.mxu0 %v265
    %411 = vmatpush1.msra.mxu0 %v264
    %412 = vmatprep.subr.mxu0 %v268
    %413 = vmatpush1.msra.mxu0 %v267
    %414 = vmatprep.subr.mxu0 %v271
    %415 = vmatpush1.msra.mxu0 %v270
    %416 = vmatprep.subr.mxu0 %v274
    %417 = vmatpush1.msra.mxu0 %v273
    %418 = vmatprep.subr.mxu0 %v277
    %419 = vmatpush1.msra.mxu0 %v276
    %420 = vmatprep.subr.mxu0 %v280
    %421 = vmatpush1.msra.mxu0 %v279
    %422 = vmatprep.subr.mxu0 %v283
    %423 = vmatpush1.msra.mxu0 %v282
    %424 = vmatprep.subr.mxu0 %v286
    %425 = vmatpush1.msra.mxu0 %v285
    %426 = vmatprep.subr.mxu0 %v289
    %427 = vmatpush1.msra.mxu0 %v288
    %428 = vmatprep.subr.mxu0 %v292
    %429 = vmatpush1.msra.mxu0 %v291
    %430 = vmatprep.subr.mxu0 %v295
    %431 = vmatpush1.msra.mxu0 %v294
    %432 = vmatprep.subr.mxu0 %v298
    %433 = vmatpush1.msra.mxu0 %v297
    %434 = vmatprep.subr.mxu0 %v301
    %435 = vmatpush1.msra.mxu0 %v300
    %436 = vmatprep.subr.mxu0 %v304
    %437 = vmatpush1.msra.mxu0 %v303
    %438 = vmatprep.subr.mxu0 %v307
    %439 = vmatpush1.msra.mxu0 %v306
    %440 = vmatprep.subr.mxu0 %v310
    %441 = vmatpush1.msra.mxu0 %v309
    %442 = vmatprep.mubr.f32.mxu0 %v214
    %443 = vmatmul.mubr.f32.gmra.mrb[0].mxu0 %v213
    %v444 = vpop.f32.mrb[0].mxu0
    %v445 = vadd.f32 %v366, %v444
    %v446 = vpop.f32.mrb[0].mxu0
    %v447 = vadd.f32 %v370, %v446
    %448 = vdwg.mxu0
    %449 = vmatprep.subr.mxu0 %v313
    %450 = vmatpush1.msra.mxu0 %v312
    %451 = vmatprep.subr.mxu0 %v316
    %452 = vmatpush1.msra.mxu0 %v315
    %453 = vmatprep.subr.mxu0 %v319
    %454 = vmatpush1.msra.mxu0 %v318
    %455 = vmatprep.subr.mxu0 %v322
    %456 = vmatpush1.msra.mxu0 %v321
    %457 = vmatprep.subr.mxu0 %v325
    %458 = vmatpush1.msra.mxu0 %v324
    %459 = vmatprep.subr.mxu0 %v328
    %460 = vmatpush1.msra.mxu0 %v327
    %461 = vmatprep.subr.mxu0 %v331
    %462 = vmatpush1.msra.mxu0 %v330
    %463 = vmatprep.subr.mxu0 %v334
    %464 = vmatpush1.msra.mxu0 %v333
    %465 = vmatprep.subr.mxu0 %v337
    %466 = vmatpush1.msra.mxu0 %v336
    %467 = vmatprep.subr.mxu0 %v340
    %468 = vmatpush1.msra.mxu0 %v339
    %469 = vmatprep.subr.mxu0 %v343
    %470 = vmatpush1.msra.mxu0 %v342
    %471 = vmatprep.subr.mxu0 %v346
    %472 = vmatpush1.msra.mxu0 %v345
    %473 = vmatprep.subr.mxu0 %v349
    %474 = vmatpush1.msra.mxu0 %v348
    %475 = vmatprep.subr.mxu0 %v352
    %476 = vmatpush1.msra.mxu0 %v351
    %477 = vmatprep.subr.mxu0 %v355
    %478 = vmatpush1.msra.mxu0 %v354
    %479 = vmatprep.subr.mxu0 %v358
    %480 = vmatpush1.msra.mxu0 %v357
    %481 = vmatprep.subr.mxu0 0.0
    %482 = vmatpush1.msra.mxu0 0.0
    %483 = vmatprep.subr.mxu0 0.0
    %484 = vmatpush1.msra.mxu0 0.0
    %485 = vmatprep.subr.mxu0 0.0
    %486 = vmatpush1.msra.mxu0 0.0
    %487 = vmatprep.subr.mxu0 0.0
    %488 = vmatpush1.msra.mxu0 0.0
    %489 = vmatprep.subr.mxu0 0.0
    %490 = vmatpush1.msra.mxu0 0.0
    %491 = vmatprep.subr.mxu0 0.0
    %492 = vmatpush1.msra.mxu0 0.0
    %493 = vmatprep.subr.mxu0 0.0
    %494 = vmatpush1.msra.mxu0 0.0
    %495 = vmatprep.subr.mxu0 0.0
    %496 = vmatpush1.msra.mxu0 0.0
    %497 = vmatprep.subr.mxu0 0.0
    %498 = vmatpush1.msra.mxu0 0.0
    %499 = vmatprep.subr.mxu0 0.0
    %500 = vmatpush1.msra.mxu0 0.0
    %501 = vmatprep.subr.mxu0 0.0
    %502 = vmatpush1.msra.mxu0 0.0
    %503 = vmatprep.subr.mxu0 0.0
    %504 = vmatpush1.msra.mxu0 0.0
    %505 = vmatprep.subr.mxu0 0.0
    %506 = vmatpush1.msra.mxu0 0.0
    %507 = vmatprep.subr.mxu0 0.0
    %508 = vmatpush1.msra.mxu0 0.0
    %509 = vmatprep.subr.mxu0 0.0
    %510 = vmatpush1.msra.mxu0 0.0
    %511 = vmatprep.subr.mxu0 0.0
    %512 = vmatpush1.msra.mxu0 0.0
    %513 = vmatprep.mubr.f32.mxu0 0.0
    %514 = vmatmul.mubr.f32.gmra.mrb[0].mxu0 %v215
    %v515 = vpop.f32.mrb[0].mxu0
    %v516 = vadd.f32 %v445, %v515
    %v517 = vpop.f32.mrb[0].mxu0
    %v518 = vadd.f32 %v447, %v517
    %519 = vdwg.mxu0
    %520 = vmatprep.subr.mxu0 0.0
    %521 = vmatpush1.msra.mxu0 %v218
    %522 = vmatprep.subr.mxu0 0.0
    %523 = vmatpush1.msra.mxu0 %v221
    %524 = vmatprep.subr.mxu0 0.0
    %525 = vmatpush1.msra.mxu0 %v224
    %526 = vmatprep.subr.mxu0 0.0
    %527 = vmatpush1.msra.mxu0 %v227
    %528 = vmatprep.subr.mxu0 0.0
    %529 = vmatpush1.msra.mxu0 %v230
    %530 = vmatprep.subr.mxu0 0.0
    %531 = vmatpush1.msra.mxu0 %v233
    %532 = vmatprep.subr.mxu0 0.0
    %533 = vmatpush1.msra.mxu0 %v236
    %534 = vmatprep.subr.mxu0 0.0
    %535 = vmatpush1.msra.mxu0 %v239
    %536 = vmatprep.subr.mxu0 0.0
    %537 = vmatpush1.msra.mxu0 %v242
    %538 = vmatprep.subr.mxu0 0.0
    %539 = vmatpush1.msra.mxu0 %v245
    %540 = vmatprep.subr.mxu0 0.0
    %541 = vmatpush1.msra.mxu0 %v248
    %542 = vmatprep.subr.mxu0 0.0
    %543 = vmatpush1.msra.mxu0 %v251
    %544 = vmatprep.subr.mxu0 0.0
    %545 = vmatpush1.msra.mxu0 %v254
    %546 = vmatprep.subr.mxu0 0.0
    %547 = vmatpush1.msra.mxu0 %v257
    %548 = vmatprep.subr.mxu0 0.0
    %549 = vmatpush1.msra.mxu0 %v260
    %550 = vmatprep.subr.mxu0 0.0
    %551 = vmatpush1.msra.mxu0 %v263
    %552 = vmatprep.subr.mxu0 0.0
    %553 = vmatpush1.msra.mxu0 %v266
    %554 = vmatprep.subr.mxu0 0.0
    %555 = vmatpush1.msra.mxu0 %v269
    %556 = vmatprep.subr.mxu0 0.0
    %557 = vmatpush1.msra.mxu0 %v272
    %558 = vmatprep.subr.mxu0 0.0
    %559 = vmatpush1.msra.mxu0 %v275
    %560 = vmatprep.subr.mxu0 0.0
    %561 = vmatpush1.msra.mxu0 %v278
    %562 = vmatprep.subr.mxu0 0.0
    %563 = vmatpush1.msra.mxu0 %v281
    %564 = vmatprep.subr.mxu0 0.0
    %565 = vmatpush1.msra.mxu0 %v284
    %566 = vmatprep.subr.mxu0 0.0
    %567 = vmatpush1.msra.mxu0 %v287
    %568 = vmatprep.subr.mxu0 0.0
    %569 = vmatpush1.msra.mxu0 %v290
    %570 = vmatprep.subr.mxu0 0.0
    %571 = vmatpush1.msra.mxu0 %v293
    %572 = vmatprep.subr.mxu0 0.0
    %573 = vmatpush1.msra.mxu0 %v296
    %574 = vmatprep.subr.mxu0 0.0
    %575 = vmatpush1.msra.mxu0 %v299
    %576 = vmatprep.subr.mxu0 0.0
    %577 = vmatpush1.msra.mxu0 %v302
    %578 = vmatprep.subr.mxu0 0.0
    %579 = vmatpush1.msra.mxu0 %v305
    %580 = vmatprep.subr.mxu0 0.0
    %581 = vmatpush1.msra.mxu0 %v308
    %582 = vmatprep.subr.mxu0 0.0
    %583 = vmatpush1.msra.mxu0 %v311
    %584 = vmatprep.mubr.f32.mxu0 %v214
    %585 = vmatmul.mubr.f32.gmra.mrb[0].mxu0 %v213
    %v586 = vpop.f32.mrb[0].mxu0
    %v587 = vadd.f32 %v374, %v586
    %v588 = vpop.f32.mrb[0].mxu0
    %589 = vdwg.mxu0
    %590 = vmatprep.subr.mxu0 0.0
    %591 = vmatpush1.msra.mxu0 %v314
    %592 = vmatprep.subr.mxu0 0.0
    %593 = vmatpush1.msra.mxu0 %v317
    %594 = vmatprep.subr.mxu0 0.0
    %595 = vmatpush1.msra.mxu0 %v320
    %596 = vmatprep.subr.mxu0 0.0
    %597 = vmatpush1.msra.mxu0 %v323
    %598 = vmatprep.subr.mxu0 0.0
    %599 = vmatpush1.msra.mxu0 %v326
    %600 = vmatprep.subr.mxu0 0.0
    %601 = vmatpush1.msra.mxu0 %v329
    %602 = vmatprep.subr.mxu0 0.0
    %603 = vmatpush1.msra.mxu0 %v332
    %604 = vmatprep.subr.mxu0 0.0
    %605 = vmatpush1.msra.mxu0 %v335
    %606 = vmatprep.subr.mxu0 0.0
    %607 = vmatpush1.msra.mxu0 %v338
    %608 = vmatprep.subr.mxu0 0.0
    %609 = vmatpush1.msra.mxu0 %v341
    %610 = vmatprep.subr.mxu0 0.0
    %611 = vmatpush1.msra.mxu0 %v344
    %612 = vmatprep.subr.mxu0 0.0
    %613 = vmatpush1.msra.mxu0 %v347
    %614 = vmatprep.subr.mxu0 0.0
    %615 = vmatpush1.msra.mxu0 %v350
    %616 = vmatprep.subr.mxu0 0.0
    %617 = vmatpush1.msra.mxu0 %v353
    %618 = vmatprep.subr.mxu0 0.0
    %619 = vmatpush1.msra.mxu0 %v356
    %620 = vmatprep.subr.mxu0 0.0
    %621 = vmatpush1.msra.mxu0 %v359
    %622 = vmatprep.subr.mxu0 0.0
    %623 = vmatpush1.msra.mxu0 0.0
    %624 = vmatprep.subr.mxu0 0.0
    %625 = vmatpush1.msra.mxu0 0.0
    %626 = vmatprep.subr.mxu0 0.0
    %627 = vmatpush1.msra.mxu0 0.0
    %628 = vmatprep.subr.mxu0 0.0
    %629 = vmatpush1.msra.mxu0 0.0
    %630 = vmatprep.subr.mxu0 0.0
    %631 = vmatpush1.msra.mxu0 0.0
    %632 = vmatprep.subr.mxu0 0.0
    %633 = vmatpush1.msra.mxu0 0.0
    %634 = vmatprep.subr.mxu0 0.0
    %635 = vmatpush1.msra.mxu0 0.0
    %636 = vmatprep.subr.mxu0 0.0
    %637 = vmatpush1.msra.mxu0 0.0
    %638 = vmatprep.subr.mxu0 0.0
    %639 = vmatpush1.msra.mxu0 0.0
    %640 = vmatprep.subr.mxu0 0.0
    %641 = vmatpush1.msra.mxu0 0.0
    %642 = vmatprep.subr.mxu0 0.0
    %643 = vmatpush1.msra.mxu0 0.0
    %644 = vmatprep.subr.mxu0 0.0
    %645 = vmatpush1.msra.mxu0 0.0
    %646 = vmatprep.subr.mxu0 0.0
    %647 = vmatpush1.msra.mxu0 0.0
    %648 = vmatprep.subr.mxu0 0.0
    %649 = vmatpush1.msra.mxu0 0.0
    %650 = vmatprep.subr.mxu0 0.0
    %651 = vmatpush1.msra.mxu0 0.0
    %652 = vmatprep.subr.mxu0 0.0
    %653 = vmatpush1.msra.mxu0 0.0
    %654 = vmatprep.mubr.f32.mxu0 0.0
    %655 = vmatmul.mubr.f32.gmra.mrb[0].mxu0 %v215
    %v656 = vpop.f32.mrb[0].mxu0
    %v657 = vadd.f32 %v587, %v656
    %v658 = vpop.f32.mrb[0].mxu0
    %659 = vdwg.mxu0
    %v660 = vmax.f32 %v516, 0.0
    %v661 = vmax.f32 %v518, 0.0
    %v662 = vmax.f32 %v657, 0.0
    %v663 = vld [vmem:[#allocation4 + $0x510] sm:$0xff]
    %v664 = vld [vmem:[#allocation4 + $0x528] sm:$0xff]
    %v665 = vld [vmem:[#allocation4 + $0x540] sm:$0xff]
    %v666 = vld [vmem:[#allocation4 + $0x558] sm:$0xff]
    %v667 = vld [vmem:[#allocation4 + $0x570] sm:$0xff]
    %v668 = vld [vmem:[#allocation4 + $0x588] sm:$0xff]
    %v669 = vld [vmem:[#allocation4 + $0x5a0] sm:$0xff]
    %v670 = vld [vmem:[#allocation4 + $0x5b8] sm:$0xff]
    %v671 = vld [vmem:[#allocation4 + $0x5d0] sm:$0xff]
    %v672 = vld [vmem:[#allocation4 + $0x5e8] sm:$0xff]
    %v673 = vld [vmem:[#allocation4 + $0x600] sm:$0xff]
    %v674 = vld [vmem:[#allocation4 + $0x618] sm:$0xff]
    %v675 = vld [vmem:[#allocation4 + $0x630] sm:$0xff]
    %v676 = vld [vmem:[#allocation4 + $0x648] sm:$0xff]
    %v677 = vld [vmem:[#allocation4 + $0x660] sm:$0xff]
    %v678 = vld [vmem:[#allocation4 + $0x678] sm:$0xff]
    %v679 = vld [vmem:[#allocation4 + $0x690] sm:$0xff]
    %v680 = vld [vmem:[#allocation4 + $0x6a8] sm:$0xff]
    %v681 = vld [vmem:[#allocation4 + $0x6c0] sm:$0xff]
    %v682 = vld [vmem:[#allocation4 + $0x6d8] sm:$0xff]
    %v683 = vld [vmem:[#allocation4 + $0x6f0] sm:$0xff]
    %v684 = vld [vmem:[#allocation4 + $0x708] sm:$0xff]
    %v685 = vld [vmem:[#allocation4 + $0x720] sm:$0xff]
    %v686 = vld [vmem:[#allocation4 + $0x738] sm:$0xff]
    %v687 = vld [vmem:[#allocation4 + $0x750] sm:$0xff]
    %v688 = vld [vmem:[#allocation4 + $0x768] sm:$0xff]
    %v689 = vld [vmem:[#allocation4 + $0x780] sm:$0xff]
    %v690 = vld [vmem:[#allocation4 + $0x798] sm:$0xff]
    %v691 = vld [vmem:[#allocation4 + $0x7b0] sm:$0xff]
    %v692 = vld [vmem:[#allocation4 + $0x7c8] sm:$0xff]
    %v693 = vld [vmem:[#allocation4 + $0x7e0] sm:$0xff]
    %v694 = vld [vmem:[#allocation4 + $0x7f8] sm:$0xff]
    %v695 = vld [vmem:[#allocation4 + $0x810] sm:$0xff]
    %v696 = vld [vmem:[#allocation4 + $0x828] sm:$0xff]
    %v697 = vld [vmem:[#allocation4 + $0x840] sm:$0xff]
    %v698 = vld [vmem:[#allocation4 + $0x858] sm:$0xff]
    %v699 = vld [vmem:[#allocation4 + $0x870] sm:$0xff]
    %v700 = vld [vmem:[#allocation4 + $0x888] sm:$0xff]
    %v701 = vld [vmem:[#allocation4 + $0x8a0] sm:$0xff]
    %v702 = vld [vmem:[#allocation4 + $0x8b8] sm:$0xff]
    %v703 = vld [vmem:[#allocation4 + $0x8d0] sm:$0xff]
    %v704 = vld [vmem:[#allocation4 + $0x8e8] sm:$0xff]
    %v705 = vld [vmem:[#allocation4 + $0x900] sm:$0xff]
    %v706 = vld [vmem:[#allocation4 + $0x918] sm:$0xff]
    %v707 = vld [vmem:[#allocation4 + $0x930] sm:$0xff]
    %v708 = vld [vmem:[#allocation4 + $0x948] sm:$0xff]
    %v709 = vld [vmem:[#allocation4 + $0x960] sm:$0xff]
    %v710 = vld [vmem:[#allocation4 + $0x978] sm:$0xff]
    %v711 = vld [vmem:[#allocation4 + $0x990] ss:$0 sm:$0xff]
    %712 = vmatprep.subr.mxu0 0.0
    %713 = vmatpush1.msra.mxu0 %v663
    %714 = vmatprep.subr.mxu0 0.0
    %715 = vmatpush1.msra.mxu0 %v664
    %716 = vmatprep.subr.mxu0 0.0
    %717 = vmatpush1.msra.mxu0 %v665
    %718 = vmatprep.subr.mxu0 0.0
    %719 = vmatpush1.msra.mxu0 %v666
    %720 = vmatprep.subr.mxu0 0.0
    %721 = vmatpush1.msra.mxu0 %v667
    %722 = vmatprep.subr.mxu0 0.0
    %723 = vmatpush1.msra.mxu0 %v668
    %724 = vmatprep.subr.mxu0 0.0
    %725 = vmatpush1.msra.mxu0 %v669
    %726 = vmatprep.subr.mxu0 0.0
    %727 = vmatpush1.msra.mxu0 %v670
    %728 = vmatprep.subr.mxu0 0.0
    %729 = vmatpush1.msra.mxu0 %v671
    %730 = vmatprep.subr.mxu0 0.0
    %731 = vmatpush1.msra.mxu0 %v672
    %732 = vmatprep.subr.mxu0 0.0
    %733 = vmatpush1.msra.mxu0 %v673
    %734 = vmatprep.subr.mxu0 0.0
    %735 = vmatpush1.msra.mxu0 %v674
    %736 = vmatprep.subr.mxu0 0.0
    %737 = vmatpush1.msra.mxu0 %v675
    %738 = vmatprep.subr.mxu0 0.0
    %739 = vmatpush1.msra.mxu0 %v676
    %740 = vmatprep.subr.mxu0 0.0
    %741 = vmatpush1.msra.mxu0 %v677
    %742 = vmatprep.subr.mxu0 0.0
    %743 = vmatpush1.msra.mxu0 %v678
    %744 = vmatprep.subr.mxu0 0.0
    %745 = vmatpush1.msra.mxu0 %v679
    %746 = vmatprep.subr.mxu0 0.0
    %747 = vmatpush1.msra.mxu0 %v680
    %748 = vmatprep.subr.mxu0 0.0
    %749 = vmatpush1.msra.mxu0 %v681
    %750 = vmatprep.subr.mxu0 0.0
    %751 = vmatpush1.msra.mxu0 %v682
    %752 = vmatprep.subr.mxu0 0.0
    %753 = vmatpush1.msra.mxu0 %v683
    %754 = vmatprep.subr.mxu0 0.0
    %755 = vmatpush1.msra.mxu0 %v684
    %756 = vmatprep.subr.mxu0 0.0
    %757 = vmatpush1.msra.mxu0 %v685
    %758 = vmatprep.subr.mxu0 0.0
    %759 = vmatpush1.msra.mxu0 %v686
    %760 = vmatprep.subr.mxu0 0.0
    %761 = vmatpush1.msra.mxu0 %v687
    %762 = vmatprep.subr.mxu0 0.0
    %763 = vmatpush1.msra.mxu0 %v688
    %764 = vmatprep.subr.mxu0 0.0
    %765 = vmatpush1.msra.mxu0 %v689
    %766 = vmatprep.subr.mxu0 0.0
    %767 = vmatpush1.msra.mxu0 %v690
    %768 = vmatprep.subr.mxu0 0.0
    %769 = vmatpush1.msra.mxu0 %v691
    %770 = vmatprep.subr.mxu0 0.0
    %771 = vmatpush1.msra.mxu0 %v692
    %772 = vmatprep.subr.mxu0 0.0
    %773 = vmatpush1.msra.mxu0 %v693
    %774 = vmatprep.subr.mxu0 0.0
    %775 = vmatpush1.msra.mxu0 %v694
    %776 = vmatprep.mubr.f32.mxu0 %v661
    %777 = vmatmul.mubr.f32.gmra.mrb[0].mxu0 %v660
    %v778 = vpop.f32.mrb[0].mxu0
    %v779 = vadd.f32 %v711, %v778
    %v780 = vpop.f32.mrb[0].mxu0
    %781 = vdwg.mxu0
    %782 = vmatprep.subr.mxu0 0.0
    %783 = vmatpush1.msra.mxu0 %v695
    %784 = vmatprep.subr.mxu0 0.0
    %785 = vmatpush1.msra.mxu0 %v696
    %786 = vmatprep.subr.mxu0 0.0
    %787 = vmatpush1.msra.mxu0 %v697
    %788 = vmatprep.subr.mxu0 0.0
    %789 = vmatpush1.msra.mxu0 %v698
    %790 = vmatprep.subr.mxu0 0.0
    %791 = vmatpush1.msra.mxu0 %v699
    %792 = vmatprep.subr.mxu0 0.0
    %793 = vmatpush1.msra.mxu0 %v700
    %794 = vmatprep.subr.mxu0 0.0
    %795 = vmatpush1.msra.mxu0 %v701
    %796 = vmatprep.subr.mxu0 0.0
    %797 = vmatpush1.msra.mxu0 %v702
    %798 = vmatprep.subr.mxu0 0.0
    %799 = vmatpush1.msra.mxu0 %v703
    %800 = vmatprep.subr.mxu0 0.0
    %801 = vmatpush1.msra.mxu0 %v704
    %802 = vmatprep.subr.mxu0 0.0
    %803 = vmatpush1.msra.mxu0 %v705
    %804 = vmatprep.subr.mxu0 0.0
    %805 = vmatpush1.msra.mxu0 %v706
    %806 = vmatprep.subr.mxu0 0.0
    %807 = vmatpush1.msra.mxu0 %v707
    %808 = vmatprep.subr.mxu0 0.0
    %809 = vmatpush1.msra.mxu0 %v708
    %810 = vmatprep.subr.mxu0 0.0
    %811 = vmatpush1.msra.mxu0 %v709
    %812 = vmatprep.subr.mxu0 0.0
    %813 = vmatpush1.msra.mxu0 %v710
    %814 = vmatprep.subr.mxu0 0.0
    %815 = vmatpush1.msra.mxu0 0.0
    %816 = vmatprep.subr.mxu0 0.0
    %817 = vmatpush1.msra.mxu0 0.0
    %818 = vmatprep.subr.mxu0 0.0
    %819 = vmatpush1.msra.mxu0 0.0
    %820 = vmatprep.subr.mxu0 0.0
    %821 = vmatpush1.msra.mxu0 0.0
    %822 = vmatprep.subr.mxu0 0.0
    %823 = vmatpush1.msra.mxu0 0.0
    %824 = vmatprep.subr.mxu0 0.0
    %825 = vmatpush1.msra.mxu0 0.0
    %826 = vmatprep.subr.mxu0 0.0
    %827 = vmatpush1.msra.mxu0 0.0
    %828 = vmatprep.subr.mxu0 0.0
    %829 = vmatpush1.msra.mxu0 0.0
    %830 = vmatprep.subr.mxu0 0.0
    %831 = vmatpush1.msra.mxu0 0.0
    %832 = vmatprep.subr.mxu0 0.0
    %833 = vmatpush1.msra.mxu0 0.0
    %834 = vmatprep.subr.mxu0 0.0
    %835 = vmatpush1.msra.mxu0 0.0
    %836 = vmatprep.subr.mxu0 0.0
    %837 = vmatpush1.msra.mxu0 0.0
    %838 = vmatprep.subr.mxu0 0.0
    %839 = vmatpush1.msra.mxu0 0.0
    %840 = vmatprep.subr.mxu0 0.0
    %841 = vmatpush1.msra.mxu0 0.0
    %842 = vmatprep.subr.mxu0 0.0
    %843 = vmatpush1.msra.mxu0 0.0
    %844 = vmatprep.subr.mxu0 0.0
    %845 = vmatpush1.msra.mxu0 0.0
    %846 = vmatprep.mubr.f32.mxu0 0.0
    %847 = vmatmul.mubr.f32.gmra.mrb[0].mxu0 %v662
    %v848 = vpop.f32.mrb[0].mxu0
    %v849 = vadd.f32 %v779, %v848
    %v850 = vpop.f32.mrb[0].mxu0
    %851 = vdwg.mxu0
    %v852 = vlaneseq
    %v853 = vand.u32 %v852, 127
    %vm854 = vcmp.eq.s32.totalorder %v853, 0
    %v855 = vtanh.pop %v849
    %v856 = vsel %vm854, %v849, %v855
    %857 = vst [vmem:[%s2] sm:$0x3] %v856
    // Predicated region
    $region18: #{actor_critic_forward.1} parent=1 // pred_check
      _
    $region19: #{actor_critic_forward.1} parent=1 // pred_check_branch
      %859 = sbr.rel (0) target = $region21
    $region20: #{actor_critic_forward.1} parent=1 // pred_region
      _
    $region21: #{actor_critic_forward.1} parent=1 // pred_fallthru
      _
    // Predicated region
    $region22: #{actor_critic_forward.1} parent=1 // pred_check
      _
    $region23: #{actor_critic_forward.1} parent=1 // pred_check_branch
      %861 = sbr.rel (0) target = $region25
    $region24: #{actor_critic_forward.1} parent=1 // pred_region
      _
    $region25: #{actor_critic_forward.1} parent=1 // pred_fallthru
      _
    %862 = vsyncpa [#allocation3], 1
    %863 = vsyncpa [#allocation5], 1

</llo_original>
